<compile_context>
chip_gen: v6e
topology: v6e:2x2x1
jax: 0.10.0
libtpu: 0.0.40
codegen_flags: <defaults>
</compile_context>

<pallas_src>
import functools

import jax
import jax.numpy as jnp
import numpy as np
from jax.experimental import pallas as pl
from jax.experimental.pallas import tpu as pltpu


# ---------------------------------------------------------------------------
# Fused kernel: one (1, c_tile, HW) channel block per grid step.
# ---------------------------------------------------------------------------
def _eca_fused_kernel(x_ref, w_ref, halo_ref, o_ref, *, k_size, pad, inv_hw):
    """Pool -> k-tap channel conv -> sigmoid -> gate for one channel block.

    x_ref    : (1, c_tile, HW)   native dtype, lane-dense spatial axis.
    w_ref    : (k,)              f32 conv taps in SMEM.
    halo_ref : (1, 1, 1, 2*pad)  f32 pooled means of the `pad` channels on
                                 each side of this block (zero where OOB).
    o_ref    : like x_ref.
    """
    c_tile = x_ref.shape[1]

    # Global average pool over the lane-dense spatial axis (f32 accumulation).
    pooled = jnp.sum(x_ref[...], axis=-1, dtype=jnp.float32) * inv_hw  # (1, c_tile)

    if pad > 0:
        h = halo_ref[...]                                 # (1, 1, 1, 2*pad)
        left = h[0, 0, :, :pad]                           # (1, pad)
        right = h[0, 0, :, pad:]                          # (1, pad)
        yp = jnp.concatenate([left, pooled, right], axis=1)   # (1, c_tile+2p)
    else:
        yp = pooled

    # k-tap "same" channel conv as scalar-weight shifted adds (tiny vectors).
    conv = jnp.zeros((1, c_tile), jnp.float32)
    for i in range(k_size):                               # static -> unrolled
        conv = conv + w_ref[i] * yp[:, i:i + c_tile]

    scale = jax.nn.sigmoid(conv).astype(o_ref.dtype)      # (1, c_tile)
    # Re-read x_ref for the gate instead of holding the big tile live across
    # the conv/sigmoid (keeps VMEM use equal to the budgeted blocks).
    o_ref[...] = x_ref[...] * scale[:, :, None]


# ---------------------------------------------------------------------------
# Fallback gate kernel (pathological shapes only): out = x * scale.
# ---------------------------------------------------------------------------
def _gate_kernel(x_ref, s_ref, o_ref):
    o_ref[...] = x_ref[...] * s_ref[...]


# ---------------------------------------------------------------------------
# VMEM sizing helpers.
# ---------------------------------------------------------------------------
def _vmem_budget_bytes():
    cap = 64 * 1024 * 1024                 # conservative: v7x per-TC VMEM
    try:
        info = pltpu.get_tpu_info()
        cap = int(getattr(info, "vmem_capacity_bytes", cap) or cap)
    except Exception:
        pass
    return cap


def _vmem_limit(block_bytes, cap):
    need = 4 * block_bytes + (8 << 20)     # in+out blocks, double-buffered
    return int(min(cap, max(need, 32 << 20)))


def _pick_c_tile(C, HW, itemsize, cap, batch, max_c_tile=None):
    """Largest channel tile (multiple of 8, divisor of C, or C itself) whose
    double-buffered in+out blocks fit ~60% of VMEM; None -> fallback path."""
    limit = int(0.6 * cap) - (8 << 20)
    if limit <= 0:
        return None
    cands = [d for d in range(8, C + 1, 8) if C % d == 0]
    if C not in cands:
        cands.append(C)
    if max_c_tile is not None:
        smaller = [d for d in cands if d <= max_c_tile]
        cands = smaller or cands
    fitting = sorted(d for d in set(cands) if 4 * d * HW * itemsize <= limit)
    if not fitting:
        return None
    ct = fitting[-1]
    if batch == 1:
        # Keep >= 2 grid steps: feeds both v7x TensorCores and restores
        # DMA/compute pipelining at batch 1.
        halves = [d for d in fitting if d <= max(C // 2, 1)]
        if halves:
            ct = halves[-1]
    return ct


# ---------------------------------------------------------------------------
# Halo pooled means (plain JAX; reads only ~2*pad/c_tile of x).
# ---------------------------------------------------------------------------
def _halo_pooled(x2, c_tile, pad, n_c):
    B, C, _ = x2.shape
    if pad == 0 or n_c == 1:
        return jnp.zeros((B, n_c, 1, max(2 * pad, 1)), jnp.float32)
    j = jnp.arange(n_c)[:, None]
    t = jnp.arange(pad)[None, :]
    left_idx = j * c_tile - pad + t                       # (n_c, pad)
    right_idx = (j + 1) * c_tile + t                      # (n_c, pad)
    idx = jnp.concatenate([left_idx, right_idx], axis=1)  # (n_c, 2*pad)
    valid = (idx >= 0) & (idx < C)
    idx_c = jnp.clip(idx, 0, C - 1).reshape(-1)
    means = jnp.mean(x2[:, idx_c, :].astype(jnp.float32), axis=-1)  # (B, n_c*2p)
    means = means.reshape(B, n_c, 2 * pad) * valid[None].astype(jnp.float32)
    return means.reshape(B, n_c, 1, 2 * pad)


# ---------------------------------------------------------------------------
# pallas_call wrappers.
# ---------------------------------------------------------------------------
def _eca_fused(x2, w, halo, *, k_size, pad, c_tile, vmem_limit):
    B, C, HW = x2.shape
    n_c = C // c_tile
    itemsize = jnp.dtype(x2.dtype).itemsize
    kernel = functools.partial(_eca_fused_kernel, k_size=k_size, pad=pad,
                               inv_hw=float(1.0 / HW))
    halo_w = halo.shape[-1]
    return pl.pallas_call(
        kernel,
        out_shape=jax.ShapeDtypeStruct((B, C, HW), x2.dtype),
        grid=(B, n_c),
        in_specs=[
            pl.BlockSpec((1, c_tile, HW), lambda b, j: (b, j, 0)),
            pl.BlockSpec(memory_space=pltpu.MemorySpace.SMEM),
            pl.BlockSpec((1, 1, 1, halo_w), lambda b, j: (b, j, 0, 0)),
        ],
        out_specs=pl.BlockSpec((1, c_tile, HW), lambda b, j: (b, j, 0)),
        compiler_params=pltpu.CompilerParams(
            dimension_semantics=("parallel", "parallel"),
            vmem_limit_bytes=vmem_limit),
        cost_estimate=pl.CostEstimate(
            flops=2 * B * C * HW,
            transcendentals=B * C,
            bytes_accessed=2 * B * C * HW * itemsize),
    )(x2, w, halo)


def _scales_jax(x2, w, k_size, pad):
    """Pooled mean -> conv1d -> sigmoid on the tiny (B, C) tensor."""
    C = x2.shape[1]
    pooled = jnp.mean(x2.astype(jnp.float32), axis=-1)          # (B, C)
    yp = jnp.pad(pooled, ((0, 0), (pad, pad)))
    conv = sum(w[i] * yp[:, i:i + C] for i in range(k_size))
    return jax.nn.sigmoid(conv)                                 # (B, C) f32


def _eca_gate_only(x2, w, *, k_size, pad, cap):
    """Fallback for shapes where even an 8-channel full-HW block overflows
    VMEM.  TODO(synk): pooling here is done by XLA, not a Pallas kernel."""
    B, C, HW = x2.shape
    itemsize = jnp.dtype(x2.dtype).itemsize
    scale = _scales_jax(x2, w, k_size, pad).astype(x2.dtype)[:, :, None]
    ct = C if (C % 8 != 0) else min(C, 128)
    hwt = HW if HW <= 2048 else 2048                      # multiple of 128
    grid = (B, pl.cdiv(C, ct), pl.cdiv(HW, hwt))
    return pl.pallas_call(
        _gate_kernel,
        out_shape=jax.ShapeDtypeStruct((B, C, HW), x2.dtype),
        grid=grid,
        in_specs=[pl.BlockSpec((1, ct, hwt), lambda b, c, t: (b, c, t)),
                  pl.BlockSpec((1, ct, 1), lambda b, c, t: (b, c, 0))],
        out_specs=pl.BlockSpec((1, ct, hwt), lambda b, c, t: (b, c, t)),
        compiler_params=pltpu.CompilerParams(
            dimension_semantics=("parallel", "parallel", "parallel"),
            vmem_limit_bytes=_vmem_limit(ct * hwt * itemsize, cap)),
        cost_estimate=pl.CostEstimate(
            flops=B * C * HW, transcendentals=0,
            bytes_accessed=2 * B * C * HW * itemsize),
    )(x2, scale)


def eca_forward(x, w, *, max_c_tile=None, force_fallback=False):
    """ECA forward.  x: (B, C, H, W); w: (k,) Conv1d weight (no bias)."""
    B, C, H, W = x.shape
    HW = H * W
    k_size = int(w.shape[0])
    pad = (k_size - 1) // 2
    w = w.astype(jnp.float32)

    x2 = x.reshape(B, C, HW)                    # lane-dense spatial axis (free)
    itemsize = jnp.dtype(x.dtype).itemsize
    cap = _vmem_budget_bytes()

    c_tile = None if force_fallback else _pick_c_tile(
        C, HW, itemsize, cap, B, max_c_tile=max_c_tile)

    if c_tile is None:
        out2 = _eca_gate_only(x2, w, k_size=k_size, pad=pad, cap=cap)
    else:
        n_c = C // c_tile
        halo = _halo_pooled(x2, c_tile, pad, n_c)
        out2 = _eca_fused(
            x2, w, halo, k_size=k_size, pad=pad, c_tile=c_tile,
            vmem_limit=_vmem_limit(c_tile * HW * itemsize, cap))
    return out2.reshape(B, C, H, W)


# ---------------------------------------------------------------------------
# Pure-JAX reference matching the PyTorch forward.
# ---------------------------------------------------------------------------
def eca_reference(x, w):
    k = int(w.shape[0])
    pad = (k - 1) // 2
    C = x.shape[1]
    y = jnp.mean(x.astype(jnp.float32), axis=(2, 3))             # (B, C)
    yp = jnp.pad(y, ((0, 0), (pad, pad)))
    out = sum(w[i] * yp[:, i:i + C] for i in range(k))           # (B, C)
    s = jax.nn.sigmoid(out)[:, :, None, None]
    return (x * s.astype(x.dtype)).astype(x.dtype)


def _k_size_for(channels):
    k = int(abs(np.log2(np.float32(channels)) + 1.0))
    return k + 1 if k % 2 == 0 else k


if __name__ == "__main__":
    key = jax.random.PRNGKey(0)
    k1, k2, k3, k4, k5, k6 = jax.random.split(key, 6)

    # Case 1: module-default small shapes (B=2, C=4, H=W=16); k_size -> 3.
    B, C, H, W = 2, 4, 16, 16
    ks = _k_size_for(C)
    x = jax.random.normal(k1, (B, C, H, W), dtype=jnp.float32)
    bound = 1.0 / np.sqrt(ks)
    w = jax.random.uniform(k2, (ks,), dtype=jnp.float32,
                           minval=-bound, maxval=bound)
    out = jax.block_until_ready(eca_forward(x, w))
    np.testing.assert_allclose(np.asarray(out), np.asarray(eca_reference(x, w)),
                               rtol=1e-5, atol=1e-5)

    # Case 2: channel-tiled + halo path (B=1, C=32 -> k=7, forced c_tile=8).
    B2, C2, H2, W2 = 1, 32, 8, 8
    ks2 = _k_size_for(C2)
    x2 = jax.random.normal(k3, (B2, C2, H2, W2), dtype=jnp.float32)
    bound2 = 1.0 / np.sqrt(ks2)
    w2 = jax.random.uniform(k4, (ks2,), dtype=jnp.float32,
                            minval=-bound2, maxval=bound2)
    out2 = jax.block_until_ready(eca_forward(x2, w2, max_c_tile=8))
    np.testing.assert_allclose(np.asarray(out2),
                               np.asarray(eca_reference(x2, w2)),
                               rtol=1e-5, atol=1e-5)

    # Case 3: guarded fallback (XLA pool + Pallas gate) on a small shape.
    B3, C3, H3, W3 = 2, 8, 16, 16
    ks3 = _k_size_for(C3)
    x3 = jax.random.normal(k5, (B3, C3, H3, W3), dtype=jnp.float32)
    bound3 = 1.0 / np.sqrt(ks3)
    w3 = jax.random.uniform(k6, (ks3,), dtype=jnp.float32,
                            minval=-bound3, maxval=bound3)
    out3 = jax.block_until_ready(eca_forward(x3, w3, force_fallback=True))
    np.testing.assert_allclose(np.asarray(out3),
                               np.asarray(eca_reference(x3, w3)),
                               rtol=1e-5, atol=1e-5)

    print("KERNEL_OK")
</pallas_src>

<mosaic_0001>
module attributes {stable_mosaic.version = 11 : i64} {
  func.func @_eca_fused_kernel(%arg0: i32, %arg1: i32, %arg2: memref<1x4x256xf32, #tpu.memory_space<vmem>>, %arg3: memref<3xf32, #tpu.memory_space<smem>>, %arg4: memref<1x1x1x2xf32, #tpu.memory_space<vmem>>, %arg5: memref<1x4x256xf32, #tpu.memory_space<vmem>>) attributes {dimension_semantics = [#tpu.dimension_semantics<parallel>, #tpu.dimension_semantics<parallel>], iteration_bounds = array<i64: 2, 1>, scalar_prefetch = 0 : i64, scratch_operands = 0 : i64, tpu.core_type = #tpu.core_type<tc>, window_params = [{transform_indices = @transform_0, window_bounds = array<i64: 1, 4, 256>}, {transform_indices = @transform_1, window_bounds = array<i64: 3>}, {transform_indices = @transform_2, window_bounds = array<i64: 1, 1, 1, 2>}, {transform_indices = @transform_3, window_bounds = array<i64: 1, 4, 256>}]} {
    %c0 = arith.constant 0 : index
    %c0_0 = arith.constant 0 : index
    %c0_1 = arith.constant 0 : index
    %0 = vector.load %arg2[%c0, %c0_0, %c0_1] : memref<1x4x256xf32, #tpu.memory_space<vmem>>, vector<1x4x256xf32>
    %cst = arith.constant dense<0.000000e+00> : vector<1x4xf32>
    %1 = vector.multi_reduction <add>, %0, %cst [2] : vector<1x4x256xf32> to vector<1x4xf32>
    %cst_2 = arith.constant 3.906250e-03 : f32
    %2 = vector.broadcast %cst_2 : f32 to vector<1x4xf32>
    %3 = arith.mulf %1, %2 : vector<1x4xf32>
    %c0_3 = arith.constant 0 : index
    %c0_4 = arith.constant 0 : index
    %c0_5 = arith.constant 0 : index
    %c0_6 = arith.constant 0 : index
    %4 = vector.load %arg4[%c0_3, %c0_4, %c0_5, %c0_6] : memref<1x1x1x2xf32, #tpu.memory_space<vmem>>, vector<1x1x1x2xf32>
    %5 = vector.extract_strided_slice %4 {offsets = [0, 0, 0, 0], sizes = [1, 1, 1, 1], strides = [1, 1, 1, 1]} : vector<1x1x1x2xf32> to vector<1x1x1x1xf32>
    %6 = vector.shape_cast %5 : vector<1x1x1x1xf32> to vector<1x1xf32>
    %7 = vector.extract_strided_slice %4 {offsets = [0, 0, 0, 1], sizes = [1, 1, 1, 1], strides = [1, 1, 1, 1]} : vector<1x1x1x2xf32> to vector<1x1x1x1xf32>
    %8 = vector.shape_cast %7 : vector<1x1x1x1xf32> to vector<1x1xf32>
    %9 = tpu.concatenate %6, %3, %8 in 1 : vector<1x1xf32>, vector<1x4xf32>, vector<1x1xf32> -> vector<1x6xf32>
    %cst_7 = arith.constant 0.000000e+00 : f32
    %10 = vector.broadcast %cst_7 : f32 to vector<1x4xf32>
    %c0_8 = arith.constant 0 : index
    %11 = memref.load %arg3[%c0_8] : memref<3xf32, #tpu.memory_space<smem>>
    %12 = vector.extract_strided_slice %9 {offsets = [0, 0], sizes = [1, 4], strides = [1, 1]} : vector<1x6xf32> to vector<1x4xf32>
    %13 = vector.broadcast %11 : f32 to vector<1x4xf32>
    %14 = arith.mulf %13, %12 : vector<1x4xf32>
    %15 = arith.addf %10, %14 : vector<1x4xf32>
    %c1 = arith.constant 1 : index
    %16 = memref.load %arg3[%c1] : memref<3xf32, #tpu.memory_space<smem>>
    %17 = vector.extract_strided_slice %9 {offsets = [0, 1], sizes = [1, 4], strides = [1, 1]} : vector<1x6xf32> to vector<1x4xf32>
    %18 = vector.broadcast %16 : f32 to vector<1x4xf32>
    %19 = arith.mulf %18, %17 : vector<1x4xf32>
    %20 = arith.addf %15, %19 : vector<1x4xf32>
    %c2 = arith.constant 2 : index
    %21 = memref.load %arg3[%c2] : memref<3xf32, #tpu.memory_space<smem>>
    %22 = vector.extract_strided_slice %9 {offsets = [0, 2], sizes = [1, 4], strides = [1, 1]} : vector<1x6xf32> to vector<1x4xf32>
    %23 = vector.broadcast %21 : f32 to vector<1x4xf32>
    %24 = arith.mulf %23, %22 : vector<1x4xf32>
    %25 = arith.addf %20, %24 : vector<1x4xf32>
    %26 = arith.negf %25 : vector<1x4xf32>
    %27 = math.exp %26 : vector<1x4xf32>
    %cst_9 = arith.constant 1.000000e+00 : f32
    %28 = vector.broadcast %cst_9 : f32 to vector<1x4xf32>
    %29 = arith.addf %28, %27 : vector<1x4xf32>
    %30 = arith.divf %28, %29 : vector<1x4xf32>
    %c0_10 = arith.constant 0 : index
    %c0_11 = arith.constant 0 : index
    %c0_12 = arith.constant 0 : index
    %31 = vector.load %arg2[%c0_10, %c0_11, %c0_12] : memref<1x4x256xf32, #tpu.memory_space<vmem>>, vector<1x4x256xf32>
    %32 = vector.shape_cast %30 : vector<1x4xf32> to vector<1x4x1xf32>
    %33 = vector.broadcast %32 : vector<1x4x1xf32> to vector<1x4x256xf32>
    %34 = arith.mulf %31, %33 : vector<1x4x256xf32>
    %c0_13 = arith.constant 0 : index
    %c0_14 = arith.constant 0 : index
    %c0_15 = arith.constant 0 : index
    %35 = vector.load %arg5[%c0_13, %c0_14, %c0_15] : memref<1x4x256xf32, #tpu.memory_space<vmem>>, vector<1x4x256xf32>
    tpu.vector_store %arg5[%c0_13, %c0_14, %c0_15], %34 {strides = array<i32>} : memref<1x4x256xf32, #tpu.memory_space<vmem>>, vector<1x4x256xf32>,
    return
  }
  func.func @transform_0(%arg0: i32, %arg1: i32) -> (i32, i32, i32) {
    %c0_i32 = arith.constant 0 : i32
    %c0_i32_0 = arith.constant 0 : i32
    return %arg0, %arg1, %c0_i32 : i32, i32, i32
  }
  func.func @transform_1(%arg0: i32, %arg1: i32) -> i32 {
    %c0_i32 = arith.constant 0 : i32
    %c0_i32_0 = arith.constant 0 : i32
    return %c0_i32 : i32
  }
  func.func @transform_2(%arg0: i32, %arg1: i32) -> (i32, i32, i32, i32) {
    %c0_i32 = arith.constant 0 : i32
    %c0_i32_0 = arith.constant 0 : i32
    %c0_i32_1 = arith.constant 0 : i32
    return %arg0, %arg1, %c0_i32, %c0_i32_0 : i32, i32, i32, i32
  }
  func.func @transform_3(%arg0: i32, %arg1: i32) -> (i32, i32, i32) {
    %c0_i32 = arith.constant 0 : i32
    %c0_i32_0 = arith.constant 0 : i32
    return %arg0, %arg1, %c0_i32 : i32, i32, i32
  }
}

</mosaic_0001>

<llo_original>
// kernel: tpu_custom_call.1
$region0: #{tpu_custom_call.1}
  #allocation0 [shape = 'u32[]', space=smem, size = 0x4, offset = 0x4, fixed_abs, tag = 'smem constant byte address 0x4 - core index']
  #allocation1 [shape = 'u32[144,128]{1,0:T(1,128)}', space=vmem, size = 0x12000, scoped, tag = 'internal scratch']
  %s0 = inlined_call_operand.hbm [shape: f32[2,4,256], index: 0, kind: input, shape index: {}]
  %s1 = inlined_call_operand.vmem [shape: f32[3], index: 1, kind: input, shape index: {}]
  %s2 = inlined_call_operand.vmem [shape: f32[2,1,1,2], index: 2, kind: input, shape index: {}]
  %s3 = inlined_call_operand.hbm [shape: f32[2,4,256], index: 3, kind: output, shape index: {}]
  %s4 = sld [smem:[#allocation0]]
  $region53: #{tpu_custom_call.1} parent=0
    _
  %s6 = ssub.s32 1, %s4
  %s7 = scalar_select 0, %s6, %s4
  $region1: #{tpu_custom_call.1} parent=0
    #allocation2 [shape = 'u8[8192]{0}', space=vmem, size = 0x2000, scoped, tag = 'input window, operand 0']
    #allocation3 [shape = 's32[2]{0}', space=sflag, size = 0x8, scoped, tag = 'scoped memory for tpu_custom_call.1']
    #allocation4 [shape = 's32[2]{0}', space=sflag, size = 0x8, scoped, tag = 'scoped memory for tpu_custom_call.1']
    #allocation5 [shape = 's32[2]{0}', space=sflag, size = 0x8, scoped, tag = 'scoped memory for tpu_custom_call.1']
    #allocation6 [shape = 'u8[512]{0}', space=smem, size = 0x200, scoped, tag = 'input window, operand 1, single buffered']
    #allocation7 [shape = 'u8[8192]{0}', space=vmem, size = 0x2000, scoped, tag = 'output window, operand 0']
    %8 = vsyncpa [#allocation3], 0
    %s9 = scalar_lea.sflag [#allocation3], 1
    %10 = vsyncpa %s9, 0
    %11 = vsyncpa [#allocation5], 0
    %12 = vsyncpa [#allocation4], 0
    %s13 = scalar_lea.sflag [#allocation4], 1
    %14 = vsyncpa %s13, 0
    loop: start=0, step=1, limit=4
    $region2: #{tpu_custom_call.1} parent=1 // loop_pre_header
      _
    $region3: #{tpu_custom_call.1} parent=1 // loop_header
      %s16 = sphi 0, %s20
      %p17 = scmp.ge.s32.totalorder %s16, 4
      %s23 = sphi 0, %s35
      %s24 = sphi 0, %s31
      %s25 = sphi 0, %s23
      %s26 = sphi 0, %s24
      %s27 = sphi 0, %s25
      %s28 = sphi 0, %s26
      %s40 = sphi 0, %s42
      %s43 = sphi 0, %s40
      %s44 = sphi 0, %s43
      %s60 = sphi 0, %s44
      %s64 = sphi 0, %s64
      %s66 = sphi 0, %s64
      %s67 = sphi 0, %s66
      %s81 = sphi 0, %s67
      %s89 = sphi 0, %s91
      %s92 = sphi 0, %s89
      %s93 = sphi 0, %s92
      %s109 = sphi 0, %s93
      %s117 = sphi 0, %s119
      %s120 = sphi 0, %s117
      %s121 = sphi 0, %s120
      %s137 = sphi 0, %s121
    $region4: #{tpu_custom_call.1} parent=1 // loop_header_branch
      %19 = sbr.rel (%p17) target = $region8
    $region5: #{tpu_custom_call.1} parent=1 // loop_body
      %s21 = ssub.s32 %s16, 1
      %s22 = ssub.s32 %s16, 2
      %s29 = sadd.s32 1, %s24
      %p30 = scmp.ge.s32.totalorder %s29, 1
      %s31 = scalar_select %p30, 0, %s29
      %s32 = sadd.s32 1, %s23
      %s33 = scalar_select %p30, %s32, %s23
      %p34 = scmp.ge.s32.totalorder %s33, 2
      %s35 = scalar_select %p34, 0, %s33
      %s36 = ssub.s32 %s23, %s35
      %s37 = ssub.s32 %s24, %s31
      %s38 = sor.u32 %s36, %s37
      %p39 = scmp.eq.s32.totalorder %s38, 0
      %s41 = sadd.s32 %s40, 1
      %s42 = scalar_select %p39, %s40, %s41
      %p45 = pneg %p39
      %p46 = scmp.eq.s32.totalorder %s16, 1
      %p47 = por %p45, %p46
      %p48 = scmp.ne.s32.totalorder %s40, %s43
      %p49 = scmp.eq.s32.totalorder %s16, 0
      %p50 = por %p48, %p49
      %p51 = scmp.ne.s32.totalorder %s40, %s43
      %p52 = scmp.eq.s32.totalorder %s21, 1
      %p53 = por %p51, %p52
      %p54 = scmp.ne.s32.totalorder %s43, %s44
      %p55 = scmp.eq.s32.totalorder %s21, 0
      %p56 = por %p54, %p55
      %p57 = scmp.ne.s32.totalorder %s43, %s44
      %p58 = scmp.eq.s32.totalorder %s22, 1
      %p59 = por %p57, %p58
      %p61 = scmp.ne.s32.totalorder %s44, %s60
      %p62 = scmp.eq.s32.totalorder %s22, 0
      %p63 = por %p61, %p62
      %s65 = sadd.s32 %s64, 1
      %p68 = scmp.eq.s32.totalorder %s16, 1
      %p69 = scmp.ne.s32.totalorder %s64, %s66
      %p70 = scmp.eq.s32.totalorder %s16, 0
      %p71 = por %p69, %p70
      %p72 = scmp.ne.s32.totalorder %s64, %s66
      %p73 = scmp.eq.s32.totalorder %s21, 1
      %p74 = por %p72, %p73
      %p75 = scmp.ne.s32.totalorder %s66, %s67
      %p76 = scmp.eq.s32.totalorder %s21, 0
      %p77 = por %p75, %p76
      %p78 = scmp.ne.s32.totalorder %s66, %s67
      %p79 = scmp.eq.s32.totalorder %s22, 1
      %p80 = por %p78, %p79
      %p82 = scmp.ne.s32.totalorder %s67, %s81
      %p83 = scmp.eq.s32.totalorder %s22, 0
      %p84 = por %p82, %p83
      %s85 = ssub.s32 %s23, %s35
      %s86 = ssub.s32 %s24, %s31
      %s87 = sor.u32 %s85, %s86
      %p88 = scmp.eq.s32.totalorder %s87, 0
      %s90 = sadd.s32 %s89, 1
      %s91 = scalar_select %p88, %s89, %s90
      %p94 = pneg %p88
      %p95 = scmp.eq.s32.totalorder %s16, 1
      %p96 = por %p94, %p95
      %p97 = scmp.ne.s32.totalorder %s89, %s92
      %p98 = scmp.eq.s32.totalorder %s16, 0
      %p99 = por %p97, %p98
      %p100 = scmp.ne.s32.totalorder %s89, %s92
      %p101 = scmp.eq.s32.totalorder %s21, 1
      %p102 = por %p100, %p101
      %p103 = scmp.ne.s32.totalorder %s92, %s93
      %p104 = scmp.eq.s32.totalorder %s21, 0
      %p105 = por %p103, %p104
      %p106 = scmp.ne.s32.totalorder %s92, %s93
      %p107 = scmp.eq.s32.totalorder %s22, 1
      %p108 = por %p106, %p107
      %p110 = scmp.ne.s32.totalorder %s93, %s109
      %p111 = scmp.eq.s32.totalorder %s22, 0
      %p112 = por %p110, %p111
      %s113 = ssub.s32 %s23, %s35
      %s114 = ssub.s32 %s24, %s31
      %s115 = sor.u32 %s113, %s114
      %p116 = scmp.eq.s32.totalorder %s115, 0
      %s118 = sadd.s32 %s117, 1
      %s119 = scalar_select %p116, %s117, %s118
      %p122 = pneg %p116
      %p123 = scmp.eq.s32.totalorder %s16, 1
      %p124 = por %p122, %p123
      %p125 = scmp.ne.s32.totalorder %s117, %s120
      %p126 = scmp.eq.s32.totalorder %s16, 0
      %p127 = por %p125, %p126
      %p128 = scmp.ne.s32.totalorder %s117, %s120
      %p129 = scmp.eq.s32.totalorder %s21, 1
      %p130 = por %p128, %p129
      %p131 = scmp.ne.s32.totalorder %s120, %s121
      %p132 = scmp.eq.s32.totalorder %s21, 0
      %p133 = por %p131, %p132
      %p134 = scmp.ne.s32.totalorder %s120, %s121
      %p135 = scmp.eq.s32.totalorder %s22, 1
      %p136 = por %p134, %p135
      %p138 = scmp.ne.s32.totalorder %s121, %s137
      %p139 = scmp.eq.s32.totalorder %s22, 0
      %p140 = por %p138, %p139
      %p141 = scmp.le.s32.totalorder 1, %s16
      %p142 = scmp.lt.s32.totalorder %s16, 3
      %p143 = pnand %p141, %p142
      %p144 = pneg %p143
      // Predicated region
      $region9: #{tpu_custom_call.1} parent=5 // pred_check
        _
      $region10: #{tpu_custom_call.1} parent=5 // pred_check_branch
        %146 = sbr.rel (%p143) target = $region12
      $region11: #{tpu_custom_call.1} parent=5 // pred_region
        %s147 = ssub.s32 %s16, 1
        // Predicated region
        $region13: #{tpu_custom_call.1} parent=11 // pred_check
          %p148 = pneg %p77
        $region14: #{tpu_custom_call.1} parent=11 // pred_check_branch
          %150 = sbr.rel (%p148) target = $region16
        $region15: #{tpu_custom_call.1} parent=11 // pred_region
          %s152 = ssub.s32 16, 16
          %153 = vsyncadd [#allocation5], %s152
          %s155 = sshll.u32 %s1, 4
          %s156 = int_to_ptr.vmem [resolvable:$true] %s155
          %158 = dma.vmem_to_smem %s156, 16, [#allocation6], [#allocation5]
        $region16: #{tpu_custom_call.1} parent=11 // pred_fallthru
          _
      $region12: #{tpu_custom_call.1} parent=5 // pred_fallthru
        _
      %p159 = scmp.lt.s32.totalorder %s16, 2
      // Predicated region
      $region17: #{tpu_custom_call.1} parent=5 // pred_check
        %p160 = pneg %p159
      $region18: #{tpu_custom_call.1} parent=5 // pred_check_branch
        %162 = sbr.rel (%p160) target = $region20
      $region19: #{tpu_custom_call.1} parent=5 // pred_region
        // Predicated region
        $region21: #{tpu_custom_call.1} parent=19 // pred_check
          %p163 = pneg %p50
        $region22: #{tpu_custom_call.1} parent=19 // pred_check_branch
          %165 = sbr.rel (%p163) target = $region24
        $region23: #{tpu_custom_call.1} parent=19 // pred_region
          %s166 = sand.u32 %s40, 1
          %s167 = scalar_lea.sflag [#allocation3], %s166
          %s168 = sand.u32 %s40, 1
          %s169 = smul.addr %s168, 8
          %s170 = scalar_lea.vmem [#allocation2], %s169
          %s172 = ssub.s32 128, 128
          %173 = vsyncadd %s167, %s172
          %s174 = smul.addr %s24, 2
          %s175 = smul.addr %s23, 2
          %s176 = sadd.s32 %s174, %s175
          %s177 = smul.addr %s176, 64
          %s178 = scalar_lea.hbm %s0, %s177
          %s180 = sshll.u32 %s170, 4
          %s181 = int_to_ptr.vmem [resolvable:$true] %s180
          %183 = dma.hbm_to_vmem [thread:$0]  %s178, 128, %s181, %s167
        $region24: #{tpu_custom_call.1} parent=19 // pred_fallthru
          _
        // Predicated region
        $region25: #{tpu_custom_call.1} parent=19 // pred_check
          %p184 = pneg %p99
        $region26: #{tpu_custom_call.1} parent=19 // pred_check_branch
          %186 = sbr.rel (%p184) target = $region28
        $region27: #{tpu_custom_call.1} parent=19 // pred_region
          %p187 = scmp.lt.s32.totalorder %s23, 1
          %s188 = scalar_select %p187, %s23, 1
          %p189 = scmp.lt.s32.totalorder %s24, 0
          %s190 = scalar_select %p189, %s24, 0
          %s191 = sadd.s32 %s190, %s188
          %s192 = scalar_lea.vmem %s2, %s191
        $region28: #{tpu_custom_call.1} parent=19 // pred_fallthru
          _
      $region20: #{tpu_custom_call.1} parent=5 // pred_fallthru
        _
      %p193 = scmp.le.s32.totalorder 1, %s16
      %p194 = scmp.lt.s32.totalorder %s16, 3
      %p195 = pnand %p193, %p194
      %p196 = pneg %p195
      // Predicated region
      $region29: #{tpu_custom_call.1} parent=5 // pred_check
        _
      $region30: #{tpu_custom_call.1} parent=5 // pred_check_branch
        %198 = sbr.rel (%p195) target = $region32
      $region31: #{tpu_custom_call.1} parent=5 // pred_region
        %s199 = ssub.s32 %s16, 1
        %s200 = sand.u32 %s43, 1
        %s201 = scalar_lea.sflag [#allocation3], %s200
        %s202 = sand.u32 %s43, 1
        %s203 = smul.addr %s202, 8
        %s204 = scalar_lea.vmem [#allocation2], %s203
        // Predicated region
        $region33: #{tpu_custom_call.1} parent=31 // pred_check
          %p205 = pneg %p56
        $region34: #{tpu_custom_call.1} parent=31 // pred_check_branch
          %207 = sbr.rel (%p205) target = $region36
        $region35: #{tpu_custom_call.1} parent=31 // pred_region
          %208 = dma.done %s201, 128
        $region36: #{tpu_custom_call.1} parent=31 // pred_fallthru
          _
        // Predicated region
        $region37: #{tpu_custom_call.1} parent=31 // pred_check
          %p209 = pneg %p77
        $region38: #{tpu_custom_call.1} parent=31 // pred_check_branch
          %211 = sbr.rel (%p209) target = $region40
        $region39: #{tpu_custom_call.1} parent=31 // pred_region
          %212 = dma.done [#allocation5], 16
        $region40: #{tpu_custom_call.1} parent=31 // pred_fallthru
          _
        %213 = sfence
        %s214 = sand.u32 %s43, 1
        %s215 = scalar_lea.sflag [#allocation3], %s214
        %s216 = sand.u32 %s43, 1
        %s217 = smul.addr %s216, 8
        %s218 = scalar_lea.vmem [#allocation2], %s217
        %p219 = pneg %p56
        %p220 = pneg %p53
        %p221 = pneg %p77
        %p222 = pneg %p74
        %p223 = scmp.lt.s32.totalorder %s25, 1
        %s224 = scalar_select %p223, %s25, 1
        %p225 = scmp.lt.s32.totalorder %s26, 0
        %s226 = scalar_select %p225, %s26, 0
        %s227 = sadd.s32 %s226, %s224
        %s228 = scalar_lea.vmem %s2, %s227
        %p229 = pneg %p105
        %p230 = pneg %p102
        %p231 = pneg %p133
        %p232 = pneg %p130
        %s233 = sand.u32 %s120, 1
        %s234 = scalar_lea.sflag [#allocation4], %s233
        %s235 = sand.u32 %s120, 1
        %s236 = smul.addr %s235, 8
        %s237 = scalar_lea.vmem [#allocation7], %s236
        %p238 = scmp.lt.s32.totalorder %s25, 1
        %s239 = scalar_select %p238, %s25, 1
        %p240 = scmp.lt.s32.totalorder %s26, 0
        %s241 = scalar_select %p240, %s26, 0
        %s242 = sadd.s32 %s241, %s239
        %s243 = scalar_lea.vmem %s2, %s242
        %v244 = vld [vmem:[%s204] sm:$0xff]
        %v246 = vcombine.high %v244, %v244
        %vm248 = vcmask 1043456
        %v249 = vsel %vm248, %v244, 0.0
        %v250 = vsel %vm248, %v246, 0.0
        %v251 = vadd.f32 %v249, %v250
        %252 = vadd.xlane.f32.xlu0 %v251
        %v253 = vpop.xlane.xlu0 %252
        %v254 = vmul.f32 %v253, 0.00390625
        %v255 = vld [vmem:[%s243] sm:$0x1]
        %v257 = vlaneseq
        %v258 = vand.u32 %v257, 127
        %v259 = vadd.s32 %v258, 4294967295
        %v260 = vlaneseq
        %v261 = vshrl.u32 %v260, 7
        %v262 = vsub.s32 %v259, %v261
        %v263 = vrot.slane %v254, %v262
        %v266 = vlaneseq
        %v267 = vshrl.u32 %v266, 7
        %v268 = vsub.s32 0, %v267
        %v269 = vrot.slane %v255, %v268
        %270 = vrot.lane.b32.xlu0 %v269, 4
        %v271 = vpop.permute.xlu0 %270
        %vm273 = vcmask 7168
        %v274 = vsel %vm273, %v255, %v263
        %vm275 = vcmask 39936
        %v276 = vsel %vm275, %v274, %v271
        %s277 = sld [smem:[#allocation6]]
        %v278 = vstv %s277
        %v279 = vmul.f32 %v278, %v276
        %v280 = vadd.f32 %v279, 0.0
        %s281 = sld [smem:[#allocation6 + $0x1]]
        %v282 = vstv %s281
        %v283 = vmul.f32 %v282, %v276
        %285 = vrot.lane.b32.xlu0 %v283, 127
        %v286 = vpop.permute.xlu0 %285
        %v288 = vadd.f32 %v280, %v286
        %s289 = sld [smem:[#allocation6 + $0x2]]
        %v290 = vstv %s289
        %v291 = vmul.f32 %v290, %v276
        %293 = vrot.lane.b32.xlu0 %v291, 126
        %v294 = vpop.permute.xlu0 %293
        %v296 = vadd.f32 %v288, %v294
        %v297 = vxor.u32 %v296, 2147483648
        %v298 = vmul.f32 %v297, 1.442695
        %v299 = vpow.pop %v298
        %v300 = vadd.f32 %v299, 1.0
        %v301 = vrcp.pop %v300
        %v302 = vmul.f32 1.0, %v301
        %v303 = vlaneseq
        %v304 = vshrl.u32 %v303, 7
        %v305 = vsub.s32 0, %v304
        %v306 = vrot.slane %v302, %v305
        %308 = vbcast.lane.b32.xlu0 %v306, 256
        %v309 = vpop.permute.xlu0 %308
        %v312 = vunpack.c.l.s4 839922192
        %v313 = vunpack.c.0.s8 %v312
        %v314 = vlaneseq
        %v315 = vshrl.u32 %v314, 7
        %v316 = vsub.s32 %v313, %v315
        %v317 = vrot.slane %v309, %v316
        %v319 = vmul.f32 %v244, %v317
        %320 = vst [vmem:[%s237] sm:$0xff] %v319
        %s321 = sand.u32 %s120, 1
        %s322 = scalar_lea.sflag [#allocation4], %s321
        %s323 = sand.u32 %s120, 1
        %s324 = smul.addr %s323, 8
        %s325 = scalar_lea.vmem [#allocation7], %s324
        // Predicated region
        $region41: #{tpu_custom_call.1} parent=31 // pred_check
          %p326 = pneg %p130
        $region42: #{tpu_custom_call.1} parent=31 // pred_check_branch
          %328 = sbr.rel (%p326) target = $region44
        $region43: #{tpu_custom_call.1} parent=31 // pred_region
          %s330 = ssub.s32 128, 128
          %331 = vsyncadd %s322, %s330
          %s332 = smul.addr %s26, 2
          %s333 = smul.addr %s25, 2
          %s334 = sadd.s32 %s332, %s333
          %s335 = smul.addr %s334, 64
          %s336 = scalar_lea.hbm %s3, %s335
          %s338 = sshll.u32 %s325, 4
          %s339 = int_to_ptr.vmem [resolvable:$true] %s338
          %341 = dma.vmem_to_hbm [thread:$0]  %s339, 128, %s336, %s322
        $region44: #{tpu_custom_call.1} parent=31 // pred_fallthru
          _
      $region32: #{tpu_custom_call.1} parent=5 // pred_fallthru
        _
      %p342 = scmp.le.s32.totalorder 2, %s16
      // Predicated region
      $region45: #{tpu_custom_call.1} parent=5 // pred_check
        %p343 = pneg %p342
      $region46: #{tpu_custom_call.1} parent=5 // pred_check_branch
        %345 = sbr.rel (%p343) target = $region48
      $region47: #{tpu_custom_call.1} parent=5 // pred_region
        %s346 = ssub.s32 %s16, 2
        // Predicated region
        $region49: #{tpu_custom_call.1} parent=47 // pred_check
          %p347 = pneg %p136
        $region50: #{tpu_custom_call.1} parent=47 // pred_check_branch
          %349 = sbr.rel (%p347) target = $region52
        $region51: #{tpu_custom_call.1} parent=47 // pred_region
          %s350 = sand.u32 %s121, 1
          %s351 = scalar_lea.sflag [#allocation4], %s350
          %s352 = sand.u32 %s121, 1
          %s353 = smul.addr %s352, 8
          %s354 = scalar_lea.vmem [#allocation7], %s353
          %355 = dma.done %s351, 128
        $region52: #{tpu_custom_call.1} parent=47 // pred_fallthru
          _
      $region48: #{tpu_custom_call.1} parent=5 // pred_fallthru
        _
    $region6: #{tpu_custom_call.1} parent=1 // loop_footer
      %s20 = sadd.s32 1, %s16
    $region7: #{tpu_custom_call.1} parent=1 // loop_footer_branch
      %15 = sbr.rel target = $region3
    $region8: #{tpu_custom_call.1} parent=1 // loop_exit
      _
    %356 = vsyncpa [#allocation3], 1
    %s357 = scalar_lea.sflag [#allocation3], 1
    %358 = vsyncpa %s357, 1
    %359 = vsyncpa [#allocation4], 1
    %s360 = scalar_lea.sflag [#allocation4], 1
    %361 = vsyncpa %s360, 1
    %362 = vsyncpa [#allocation5], 1
    %s363 = scalar_lea.sflag [#allocation5], 1
    %364 = vsyncpa %s363, 1

</llo_original>
